<compile_context>
chip_gen: v5e
topology: v5e:2x2
jax: 0.10.0
libtpu: 0.0.40
codegen_flags: <defaults>
</compile_context>

<pallas_src>
import functools
import numpy as np

import jax
import jax.numpy as jnp
from jax.experimental import pallas as pl
from jax.experimental.pallas import tpu as pltpu


# ----------------------------------------------------------------------------
# Utilities (mirror the PyTorch module's autopad).
# ----------------------------------------------------------------------------
def autopad(k, p=None, d=1):
    if d > 1:
        k = d * (k - 1) + 1 if isinstance(k, int) else [d * (x - 1) + 1 for x in k]
    if p is None:
        p = k // 2 if isinstance(k, int) else [x // 2 for x in k]
    return p


def _round_up(x, m):
    return ((x + m - 1) // m) * m


# ----------------------------------------------------------------------------
# Pallas kernel: one (TM, Kp) x (Kp, TN) tile per grid step.
#   out = SiLU( patches @ W_folded + bn_bias )
# (BN scale is pre-folded into W_folded; bias is the folded BN shift.)
# ----------------------------------------------------------------------------
def _conv_bn_silu_kernel(x_ref, w_ref, bias_ref, o_ref):
    # bf16 operands, f32 accumulation on the MXU.
    acc = jnp.dot(x_ref[...], w_ref[...], preferred_element_type=jnp.float32)
    y = acc + bias_ref[...]                       # folded eval-mode BN shift
    o_ref[...] = (y * jax.nn.sigmoid(y)).astype(o_ref.dtype)   # SiLU in f32


# ----------------------------------------------------------------------------
# Host-side wrapper: im2col, BN folding, lane-dense padding, pallas_call.
# ----------------------------------------------------------------------------
def conv_bn_silu_forward(x_nchw, params, *, stride=1, padding=None, dilation=1,
                         groups=1, block_m=256, block_n=256):
    if groups != 1:
        # TODO(synk): grouped conv (g>1) would need per-group matmuls.
        raise NotImplementedError("groups > 1 not implemented")

    w = params["conv_w"]                      # (C_out, C_in, kh, kw), PyTorch layout
    C_out, C_in_w, kh, kw = w.shape
    B, C_in, H, W = x_nchw.shape
    assert C_in == C_in_w and kh == kw, "demo supports square kernels, g=1"

    p = autopad(kh, padding, dilation)
    ph = pw = int(p)

    # ---- im2col (layout plumbing only; hot compute stays in the kernel) ----
    x = jnp.transpose(x_nchw, (0, 2, 3, 1))                          # NHWC
    x = jnp.pad(x, ((0, 0), (ph, ph), (pw, pw), (0, 0)))
    H_out = (H + 2 * ph - dilation * (kh - 1) - 1) // stride + 1
    W_out = (W + 2 * pw - dilation * (kw - 1) - 1) // stride + 1
    cols = []
    for i in range(kh):
        for j in range(kw):
            sl = x[:,
                   i * dilation: i * dilation + stride * (H_out - 1) + 1: stride,
                   j * dilation: j * dilation + stride * (W_out - 1) + 1: stride,
                   :]
            cols.append(sl)                                          # (B, Ho, Wo, C_in)
    patches = jnp.stack(cols, axis=3)                                # (B, Ho, Wo, kh*kw, C_in)
    M = B * H_out * W_out
    K = kh * kw * C_in
    patches = patches.reshape(M, K)

    # Weight matrix matching the patch (kh, kw, C_in) flatten order.
    w_mat = jnp.transpose(w, (2, 3, 1, 0)).reshape(K, C_out)         # (K, C_out) f32

    # Fold eval-mode BatchNorm (eps=0.001 as in the module): scale into the
    # weights (per output channel), shift stays as a bias for the epilogue.
    eps = 1e-3
    scale = params["bn_gamma"] * jax.lax.rsqrt(params["bn_var"] + eps)
    bias = params["bn_beta"] - params["bn_mean"] * scale
    w_mat = w_mat * scale[None, :]                                   # fold in f32

    # ---- pad to TPU-friendly, lane-dense shapes ----
    Kp = _round_up(K, 128)
    Cp = _round_up(C_out, 128)
    TM = min(block_m, _round_up(M, 8))
    TN = min(block_n, Cp)
    Mp = _round_up(M, TM)

    patches_p = jnp.zeros((Mp, Kp), jnp.bfloat16)
    patches_p = patches_p.at[:M, :K].set(patches.astype(jnp.bfloat16))
    w_p = jnp.zeros((Kp, Cp), jnp.bfloat16)
    w_p = w_p.at[:K, :C_out].set(w_mat.astype(jnp.bfloat16))
    bias_p = jnp.zeros((1, Cp), jnp.float32).at[0, :C_out].set(bias)

    grid = (Mp // TM, Cp // TN)

    cost = pl.CostEstimate(
        flops=2 * Mp * Kp * Cp,
        transcendentals=Mp * Cp,                       # sigmoid
        bytes_accessed=patches_p.size * 2 + w_p.size * 2
                       + bias_p.size * 4 + Mp * Cp * 4,
    )

    out = pl.pallas_call(
        _conv_bn_silu_kernel,
        out_shape=jax.ShapeDtypeStruct((Mp, Cp), jnp.float32),
        grid_spec=pltpu.PrefetchScalarGridSpec(
            num_scalar_prefetch=0,
            grid=grid,
            in_specs=[
                pl.BlockSpec((TM, Kp), lambda i, j: (i, 0)),   # patch rows
                pl.BlockSpec((Kp, TN), lambda i, j: (0, j)),   # folded weights
                pl.BlockSpec((1, TN), lambda i, j: (0, j)),    # folded BN bias
            ],
            out_specs=pl.BlockSpec((TM, TN), lambda i, j: (i, j)),
        ),
        compiler_params=pltpu.CompilerParams(
            dimension_semantics=("parallel", "parallel")),
        cost_estimate=cost,
    )(patches_p, w_p, bias_p)

    out = out[:M, :C_out].reshape(B, H_out, W_out, C_out)
    return jnp.transpose(out, (0, 3, 1, 2))                          # NCHW


# ----------------------------------------------------------------------------
# Pure-JAX reference (PyTorch semantics: conv -> eval BN -> SiLU).
# ----------------------------------------------------------------------------
def conv_bn_silu_reference(x_nchw, params, *, stride=1, padding=None,
                           dilation=1, groups=1):
    w = params["conv_w"]
    kh = w.shape[2]
    p = int(autopad(kh, padding, dilation))
    with jax.default_matmul_precision("highest"):
        y = jax.lax.conv_general_dilated(
            x_nchw, w,
            window_strides=(stride, stride),
            padding=((p, p), (p, p)),
            rhs_dilation=(dilation, dilation),
            feature_group_count=groups,
            dimension_numbers=("NCHW", "OIHW", "NCHW"),
            preferred_element_type=jnp.float32)
    eps = 1e-3
    scale = params["bn_gamma"] * jax.lax.rsqrt(params["bn_var"] + eps)
    bias = params["bn_beta"] - params["bn_mean"] * scale
    y = y * scale[None, :, None, None] + bias[None, :, None, None]
    return y * jax.nn.sigmoid(y)


def init_params(key, c1, c2, k):
    ks = jax.random.split(key, 5)
    w = jax.random.normal(ks[0], (c2, c1, k, k), jnp.float32) / np.sqrt(c1 * k * k)
    gamma = 1.0 + 0.1 * jax.random.normal(ks[1], (c2,), jnp.float32)
    beta = 0.1 * jax.random.normal(ks[2], (c2,), jnp.float32)
    mean = 0.1 * jax.random.normal(ks[3], (c2,), jnp.float32)
    var = jnp.abs(1.0 + 0.1 * jax.random.normal(ks[4], (c2,), jnp.float32))
    return dict(conv_w=w, bn_gamma=gamma, bn_beta=beta, bn_mean=mean, bn_var=var)


# ----------------------------------------------------------------------------
if __name__ == "__main__":
    # Small config consistent with the module: Conv(c1=4, c2=64, k=3, s=1).
    B, c1, c2, H, W = 2, 4, 64, 16, 16
    k, s, d, g = 3, 1, 1, 1

    key = jax.random.PRNGKey(0)
    kx, kp = jax.random.split(key)
    x = jax.random.normal(kx, (B, c1, H, W), jnp.float32)   # NCHW like PyTorch
    params = init_params(kp, c1, c2, k)

    fwd = jax.jit(functools.partial(conv_bn_silu_forward,
                                    stride=s, dilation=d, groups=g))
    out = jax.block_until_ready(fwd(x, params))

    ref = jax.block_until_ready(
        conv_bn_silu_reference(x, params, stride=s, dilation=d, groups=g))

    assert out.shape == ref.shape == (B, c2, H, W), (out.shape, ref.shape)
    err = float(jnp.max(jnp.abs(out - ref)))
    # bf16 MXU operands (deliberate) -> ~1e-2 level deviation vs f32 reference.
    assert err < 5e-2, f"max abs error too large: {err}"
    print("KERNEL_OK")
</pallas_src>

<mosaic_0001>
module attributes {stable_mosaic.version = 11 : i64} {
  func.func @_conv_bn_silu_kernel(%arg0: i32, %arg1: i32, %arg2: memref<256x128xbf16, #tpu.memory_space<vmem>>, %arg3: memref<128x128xbf16, #tpu.memory_space<vmem>>, %arg4: memref<1x128xf32, #tpu.memory_space<vmem>>, %arg5: memref<256x128xf32, #tpu.memory_space<vmem>>) attributes {dimension_semantics = [#tpu.dimension_semantics<parallel>, #tpu.dimension_semantics<parallel>], iteration_bounds = array<i64: 2, 1>, scalar_prefetch = 0 : i64, scratch_operands = 0 : i64, tpu.core_type = #tpu.core_type<tc>, window_params = [{transform_indices = @transform_0, window_bounds = array<i64: 256, 128>}, {transform_indices = @transform_1, window_bounds = array<i64: 128, 128>}, {transform_indices = @transform_2, window_bounds = array<i64: 1, 128>}, {transform_indices = @transform_3, window_bounds = array<i64: 256, 128>}]} {
    %c0 = arith.constant 0 : index
    %c0_0 = arith.constant 0 : index
    %0 = vector.load %arg2[%c0, %c0_0] : memref<256x128xbf16, #tpu.memory_space<vmem>>, vector<256x128xbf16>
    %c0_1 = arith.constant 0 : index
    %c0_2 = arith.constant 0 : index
    %1 = vector.load %arg3[%c0_1, %c0_2] : memref<128x128xbf16, #tpu.memory_space<vmem>>, vector<128x128xbf16>
    %cst = arith.constant dense<0.000000e+00> : vector<256x128xf32>
    %2 = tpu.matmul %0, %1, %cst {dimension_numbers = #tpu.dot_dimension_numbers<[1], [0], [0], [1], [0, 0, 1, 1], [], []>} : vector<256x128xbf16>, vector<128x128xbf16>, vector<256x128xf32> -> vector<256x128xf32>
    %c0_3 = arith.constant 0 : index
    %c0_4 = arith.constant 0 : index
    %3 = vector.load %arg4[%c0_3, %c0_4] : memref<1x128xf32, #tpu.memory_space<vmem>>, vector<1x128xf32>
    %4 = vector.broadcast %3 : vector<1x128xf32> to vector<256x128xf32>
    %5 = arith.addf %2, %4 : vector<256x128xf32>
    %6 = arith.negf %5 : vector<256x128xf32>
    %7 = math.exp %6 : vector<256x128xf32>
    %cst_5 = arith.constant 1.000000e+00 : f32
    %8 = vector.broadcast %cst_5 : f32 to vector<256x128xf32>
    %9 = arith.addf %8, %7 : vector<256x128xf32>
    %10 = arith.divf %8, %9 : vector<256x128xf32>
    %11 = arith.mulf %5, %10 : vector<256x128xf32>
    %c0_6 = arith.constant 0 : index
    %c0_7 = arith.constant 0 : index
    %12 = vector.load %arg5[%c0_6, %c0_7] : memref<256x128xf32, #tpu.memory_space<vmem>>, vector<256x128xf32>
    tpu.vector_store %arg5[%c0_6, %c0_7], %11 {strides = array<i32>} : memref<256x128xf32, #tpu.memory_space<vmem>>, vector<256x128xf32>,
    return
  }
  func.func @transform_0(%arg0: i32, %arg1: i32) -> (i32, i32) {
    %c0_i32 = arith.constant 0 : i32
    %c0_i32_0 = arith.constant 0 : i32
    return %arg0, %c0_i32 : i32, i32
  }
  func.func @transform_1(%arg0: i32, %arg1: i32) -> (i32, i32) {
    %c0_i32 = arith.constant 0 : i32
    %c0_i32_0 = arith.constant 0 : i32
    return %c0_i32, %arg1 : i32, i32
  }
  func.func @transform_2(%arg0: i32, %arg1: i32) -> (i32, i32) {
    %c0_i32 = arith.constant 0 : i32
    %c0_i32_0 = arith.constant 0 : i32
    return %c0_i32, %arg1 : i32, i32
  }
  func.func @transform_3(%arg0: i32, %arg1: i32) -> (i32, i32) {
    %c0_i32 = arith.constant 0 : i32
    return %arg0, %arg1 : i32, i32
  }
}

</mosaic_0001>

<llo_original>
// kernel: conv_bn_silu_forward.1
$region0: #{conv_bn_silu_forward.1}
  #allocation0 [shape = 'u32[]', space=smem, size = 0x4, offset = 0x4, fixed_abs, tag = 'smem constant byte address 0x4 - core index']
  #allocation1 [shape = 'u32[72,128]{1,0:T(1,128)}', space=vmem, size = 0x9000, scoped, tag = 'internal scratch']
  %s0 = inlined_call_operand.vmem [shape: bf16[512,128], index: 0, kind: input, shape index: {}]
  %s1 = inlined_call_operand.vmem [shape: bf16[128,128], index: 1, kind: input, shape index: {}]
  %s2 = inlined_call_operand.vmem [shape: f32[1,128], index: 2, kind: input, shape index: {}]
  %s3 = inlined_call_operand.hbm [shape: f32[512,128], index: 3, kind: output, shape index: {}]
  %s4 = sld [smem:[#allocation0]]
  $region45: #{conv_bn_silu_forward.1} parent=0
    _
  %s6 = ssub.s32 1, %s4
  %s7 = scalar_select 0, %s6, %s4
  $region1: #{conv_bn_silu_forward.1} parent=0
    #allocation2 [shape = 'u8[262144]{0}', space=vmem, size = 0x40000, scoped, tag = 'output window, operand 0']
    #allocation3 [shape = 's32[2]{0}', space=sflag, size = 0x8, scoped, tag = 'scoped memory for conv_bn_silu_forward.1']
    %8 = vsyncpa [#allocation3], 0
    %s9 = scalar_lea.sflag [#allocation3], 1
    %10 = vsyncpa %s9, 0
    loop: start=0, step=1, limit=4
    $region2: #{conv_bn_silu_forward.1} parent=1 // loop_pre_header
      _
    $region3: #{conv_bn_silu_forward.1} parent=1 // loop_header
      %s12 = sphi 0, %s16
      %p13 = scmp.ge.s32.totalorder %s12, 4
      %s19 = sphi 0, %s31
      %s20 = sphi 0, %s27
      %s21 = sphi 0, %s19
      %s22 = sphi 0, %s20
      %s23 = sphi 0, %s21
      %s24 = sphi 0, %s22
      %s34 = sphi 0, %s36
      %s37 = sphi 0, %s34
      %s38 = sphi 0, %s37
      %s54 = sphi 0, %s38
      %s60 = sphi 0, %s62
      %s63 = sphi 0, %s60
      %s64 = sphi 0, %s63
      %s80 = sphi 0, %s64
      %s86 = sphi 0, %s88
      %s89 = sphi 0, %s86
      %s90 = sphi 0, %s89
      %s106 = sphi 0, %s90
      %s114 = sphi 0, %s116
      %s117 = sphi 0, %s114
      %s118 = sphi 0, %s117
      %s134 = sphi 0, %s118
    $region4: #{conv_bn_silu_forward.1} parent=1 // loop_header_branch
      %15 = sbr.rel (%p13) target = $region8
    $region5: #{conv_bn_silu_forward.1} parent=1 // loop_body
      %s17 = ssub.s32 %s12, 1
      %s18 = ssub.s32 %s12, 2
      %s25 = sadd.s32 1, %s20
      %p26 = scmp.ge.s32.totalorder %s25, 1
      %s27 = scalar_select %p26, 0, %s25
      %s28 = sadd.s32 1, %s19
      %s29 = scalar_select %p26, %s28, %s19
      %p30 = scmp.ge.s32.totalorder %s29, 2
      %s31 = scalar_select %p30, 0, %s29
      %s32 = ssub.s32 %s19, %s31
      %p33 = scmp.eq.s32.totalorder %s32, 0
      %s35 = sadd.s32 %s34, 1
      %s36 = scalar_select %p33, %s34, %s35
      %p39 = pneg %p33
      %p40 = scmp.eq.s32.totalorder %s12, 1
      %p41 = por %p39, %p40
      %p42 = scmp.ne.s32.totalorder %s34, %s37
      %p43 = scmp.eq.s32.totalorder %s12, 0
      %p44 = por %p42, %p43
      %p45 = scmp.ne.s32.totalorder %s34, %s37
      %p46 = scmp.eq.s32.totalorder %s17, 1
      %p47 = por %p45, %p46
      %p48 = scmp.ne.s32.totalorder %s37, %s38
      %p49 = scmp.eq.s32.totalorder %s17, 0
      %p50 = por %p48, %p49
      %p51 = scmp.ne.s32.totalorder %s37, %s38
      %p52 = scmp.eq.s32.totalorder %s18, 1
      %p53 = por %p51, %p52
      %p55 = scmp.ne.s32.totalorder %s38, %s54
      %p56 = scmp.eq.s32.totalorder %s18, 0
      %p57 = por %p55, %p56
      %s58 = ssub.s32 %s20, %s27
      %p59 = scmp.eq.s32.totalorder %s58, 0
      %s61 = sadd.s32 %s60, 1
      %s62 = scalar_select %p59, %s60, %s61
      %p65 = pneg %p59
      %p66 = scmp.eq.s32.totalorder %s12, 1
      %p67 = por %p65, %p66
      %p68 = scmp.ne.s32.totalorder %s60, %s63
      %p69 = scmp.eq.s32.totalorder %s12, 0
      %p70 = por %p68, %p69
      %p71 = scmp.ne.s32.totalorder %s60, %s63
      %p72 = scmp.eq.s32.totalorder %s17, 1
      %p73 = por %p71, %p72
      %p74 = scmp.ne.s32.totalorder %s63, %s64
      %p75 = scmp.eq.s32.totalorder %s17, 0
      %p76 = por %p74, %p75
      %p77 = scmp.ne.s32.totalorder %s63, %s64
      %p78 = scmp.eq.s32.totalorder %s18, 1
      %p79 = por %p77, %p78
      %p81 = scmp.ne.s32.totalorder %s64, %s80
      %p82 = scmp.eq.s32.totalorder %s18, 0
      %p83 = por %p81, %p82
      %s84 = ssub.s32 %s20, %s27
      %p85 = scmp.eq.s32.totalorder %s84, 0
      %s87 = sadd.s32 %s86, 1
      %s88 = scalar_select %p85, %s86, %s87
      %p91 = pneg %p85
      %p92 = scmp.eq.s32.totalorder %s12, 1
      %p93 = por %p91, %p92
      %p94 = scmp.ne.s32.totalorder %s86, %s89
      %p95 = scmp.eq.s32.totalorder %s12, 0
      %p96 = por %p94, %p95
      %p97 = scmp.ne.s32.totalorder %s86, %s89
      %p98 = scmp.eq.s32.totalorder %s17, 1
      %p99 = por %p97, %p98
      %p100 = scmp.ne.s32.totalorder %s89, %s90
      %p101 = scmp.eq.s32.totalorder %s17, 0
      %p102 = por %p100, %p101
      %p103 = scmp.ne.s32.totalorder %s89, %s90
      %p104 = scmp.eq.s32.totalorder %s18, 1
      %p105 = por %p103, %p104
      %p107 = scmp.ne.s32.totalorder %s90, %s106
      %p108 = scmp.eq.s32.totalorder %s18, 0
      %p109 = por %p107, %p108
      %s110 = ssub.s32 %s19, %s31
      %s111 = ssub.s32 %s20, %s27
      %s112 = sor.u32 %s110, %s111
      %p113 = scmp.eq.s32.totalorder %s112, 0
      %s115 = sadd.s32 %s114, 1
      %s116 = scalar_select %p113, %s114, %s115
      %p119 = pneg %p113
      %p120 = scmp.eq.s32.totalorder %s12, 1
      %p121 = por %p119, %p120
      %p122 = scmp.ne.s32.totalorder %s114, %s117
      %p123 = scmp.eq.s32.totalorder %s12, 0
      %p124 = por %p122, %p123
      %p125 = scmp.ne.s32.totalorder %s114, %s117
      %p126 = scmp.eq.s32.totalorder %s17, 1
      %p127 = por %p125, %p126
      %p128 = scmp.ne.s32.totalorder %s117, %s118
      %p129 = scmp.eq.s32.totalorder %s17, 0
      %p130 = por %p128, %p129
      %p131 = scmp.ne.s32.totalorder %s117, %s118
      %p132 = scmp.eq.s32.totalorder %s18, 1
      %p133 = por %p131, %p132
      %p135 = scmp.ne.s32.totalorder %s118, %s134
      %p136 = scmp.eq.s32.totalorder %s18, 0
      %p137 = por %p135, %p136
      %p138 = scmp.le.s32.totalorder 1, %s12
      %p139 = scmp.lt.s32.totalorder %s12, 3
      %p140 = pnand %p138, %p139
      %p141 = pneg %p140
      // Predicated region
      $region9: #{conv_bn_silu_forward.1} parent=5 // pred_check
        _
      $region10: #{conv_bn_silu_forward.1} parent=5 // pred_check_branch
        %143 = sbr.rel (%p140) target = $region12
      $region11: #{conv_bn_silu_forward.1} parent=5 // pred_region
        %s144 = ssub.s32 %s12, 1
        // Predicated region
        $region13: #{conv_bn_silu_forward.1} parent=11 // pred_check
          %p145 = pneg %p76
        $region14: #{conv_bn_silu_forward.1} parent=11 // pred_check_branch
          %147 = sbr.rel (%p145) target = $region16
        $region15: #{conv_bn_silu_forward.1} parent=11 // pred_region
          %p148 = scmp.lt.s32.totalorder %s22, 0
          %s149 = scalar_select %p148, %s22, 0
          %s150 = smul.addr %s149, 4
          %s151 = scalar_lea.vmem %s1, %s150
        $region16: #{conv_bn_silu_forward.1} parent=11 // pred_fallthru
          _
        // Predicated region
        $region17: #{conv_bn_silu_forward.1} parent=11 // pred_check
          %p152 = pneg %p102
        $region18: #{conv_bn_silu_forward.1} parent=11 // pred_check_branch
          %154 = sbr.rel (%p152) target = $region20
        $region19: #{conv_bn_silu_forward.1} parent=11 // pred_region
          %p155 = scmp.lt.s32.totalorder %s22, 0
          %s156 = scalar_select %p155, %s22, 0
          %s157 = scalar_lea.vmem %s2, %s156
        $region20: #{conv_bn_silu_forward.1} parent=11 // pred_fallthru
          _
      $region12: #{conv_bn_silu_forward.1} parent=5 // pred_fallthru
        _
      %p158 = scmp.lt.s32.totalorder %s12, 2
      // Predicated region
      $region21: #{conv_bn_silu_forward.1} parent=5 // pred_check
        %p159 = pneg %p158
      $region22: #{conv_bn_silu_forward.1} parent=5 // pred_check_branch
        %161 = sbr.rel (%p159) target = $region24
      $region23: #{conv_bn_silu_forward.1} parent=5 // pred_region
        // Predicated region
        $region25: #{conv_bn_silu_forward.1} parent=23 // pred_check
          %p162 = pneg %p44
        $region26: #{conv_bn_silu_forward.1} parent=23 // pred_check_branch
          %164 = sbr.rel (%p162) target = $region28
        $region27: #{conv_bn_silu_forward.1} parent=23 // pred_region
          %s165 = smul.u32 32, %s19
          %p166 = scmp.lt.s32.totalorder %s165, 63
          %s167 = scalar_select %p166, %s165, 63
          %s168 = smul.addr %s167, 4
          %s169 = scalar_lea.vmem %s0, %s168
          %s170 = smul.u32 32, %s19
        $region28: #{conv_bn_silu_forward.1} parent=23 // pred_fallthru
          _
      $region24: #{conv_bn_silu_forward.1} parent=5 // pred_fallthru
        _
      %p171 = scmp.le.s32.totalorder 1, %s12
      %p172 = scmp.lt.s32.totalorder %s12, 3
      %p173 = pnand %p171, %p172
      %p174 = pneg %p173
      // Predicated region
      $region29: #{conv_bn_silu_forward.1} parent=5 // pred_check
        _
      $region30: #{conv_bn_silu_forward.1} parent=5 // pred_check_branch
        %176 = sbr.rel (%p173) target = $region32
      $region31: #{conv_bn_silu_forward.1} parent=5 // pred_region
        %s177 = ssub.s32 %s12, 1
        %s178 = smul.u32 32, %s21
        %p179 = scmp.lt.s32.totalorder %s178, 63
        %s180 = scalar_select %p179, %s178, 63
        %s181 = smul.addr %s180, 4
        %s182 = scalar_lea.vmem %s0, %s181
        %p183 = pneg %p50
        %p184 = pneg %p47
        %p185 = scmp.lt.s32.totalorder %s22, 0
        %s186 = scalar_select %p185, %s22, 0
        %s187 = smul.addr %s186, 4
        %s188 = scalar_lea.vmem %s1, %s187
        %p189 = pneg %p76
        %p190 = pneg %p73
        %p191 = scmp.lt.s32.totalorder %s22, 0
        %s192 = scalar_select %p191, %s22, 0
        %s193 = scalar_lea.vmem %s2, %s192
        %p194 = pneg %p102
        %p195 = pneg %p99
        %p196 = pneg %p130
        %p197 = pneg %p127
        %s198 = sand.u32 %s117, 1
        %s199 = scalar_lea.sflag [#allocation3], %s198
        %s200 = sand.u32 %s117, 1
        %s201 = smul.addr %s200, 256
        %s202 = scalar_lea.vmem [#allocation2], %s201
        %s203 = smul.u32 32, %s21
        %p204 = scmp.lt.s32.totalorder %s203, 63
        %s205 = scalar_select %p204, %s203, 63
        %s206 = smul.addr %s205, 4
        %s207 = scalar_lea.vmem %s0, %s206
        %s208 = smul.u32 32, %s21
        %p209 = scmp.lt.s32.totalorder %s22, 0
        %s210 = scalar_select %p209, %s22, 0
        %s211 = smul.addr %s210, 4
        %s212 = scalar_lea.vmem %s1, %s211
        %p213 = scmp.lt.s32.totalorder %s22, 0
        %s214 = scalar_select %p213, %s22, 0
        %s215 = scalar_lea.vmem %s2, %s214
        %s216 = smul.u32 32, %s21
        %v217 = vld [vmem:[%s207] sm:$0xf]
        %v218 = vld [vmem:[%s207 + $0x4] sm:$0xf]
        %v219 = vld [vmem:[%s207 + $0x8] sm:$0xf]
        %v220 = vld [vmem:[%s207 + $0xc] sm:$0xf]
        %v221 = vld [vmem:[%s207 + $0x10] sm:$0xf]
        %v222 = vld [vmem:[%s207 + $0x14] sm:$0xf]
        %v223 = vld [vmem:[%s207 + $0x18] sm:$0xf]
        %v224 = vld [vmem:[%s207 + $0x1c] sm:$0xf]
        %v225 = vld [vmem:[%s207 + $0x20] sm:$0xf]
        %v226 = vld [vmem:[%s207 + $0x24] sm:$0xf]
        %v227 = vld [vmem:[%s207 + $0x28] sm:$0xf]
        %v228 = vld [vmem:[%s207 + $0x2c] sm:$0xf]
        %v229 = vld [vmem:[%s207 + $0x30] sm:$0xf]
        %v230 = vld [vmem:[%s207 + $0x34] sm:$0xf]
        %v231 = vld [vmem:[%s207 + $0x38] sm:$0xf]
        %v232 = vld [vmem:[%s207 + $0x3c] sm:$0xf]
        %v233 = vld [vmem:[%s207 + $0x40] sm:$0xf]
        %v234 = vld [vmem:[%s207 + $0x44] sm:$0xf]
        %v235 = vld [vmem:[%s207 + $0x48] sm:$0xf]
        %v236 = vld [vmem:[%s207 + $0x4c] sm:$0xf]
        %v237 = vld [vmem:[%s207 + $0x50] sm:$0xf]
        %v238 = vld [vmem:[%s207 + $0x54] sm:$0xf]
        %v239 = vld [vmem:[%s207 + $0x58] sm:$0xf]
        %v240 = vld [vmem:[%s207 + $0x5c] sm:$0xf]
        %v241 = vld [vmem:[%s207 + $0x60] sm:$0xf]
        %v242 = vld [vmem:[%s207 + $0x64] sm:$0xf]
        %v243 = vld [vmem:[%s207 + $0x68] sm:$0xf]
        %v244 = vld [vmem:[%s207 + $0x6c] sm:$0xf]
        %v245 = vld [vmem:[%s207 + $0x70] sm:$0xf]
        %v246 = vld [vmem:[%s207 + $0x74] sm:$0xf]
        %v247 = vld [vmem:[%s207 + $0x78] sm:$0xf]
        %v248 = vld [vmem:[%s207 + $0x7c] sm:$0xf]
        %v249 = vld [vmem:[%s212] sm:$0xf]
        %v250 = vld [vmem:[%s212 + $0x4] sm:$0xf]
        %v251 = vld [vmem:[%s212 + $0x8] sm:$0xf]
        %v252 = vld [vmem:[%s212 + $0xc] sm:$0xf]
        %v253 = vld [vmem:[%s212 + $0x10] sm:$0xf]
        %v254 = vld [vmem:[%s212 + $0x14] sm:$0xf]
        %v255 = vld [vmem:[%s212 + $0x18] sm:$0xf]
        %v256 = vld [vmem:[%s212 + $0x1c] sm:$0xf]
        %v257 = vld [vmem:[%s212 + $0x20] sm:$0xf]
        %v258 = vld [vmem:[%s212 + $0x24] sm:$0xf]
        %v259 = vld [vmem:[%s212 + $0x28] sm:$0xf]
        %v260 = vld [vmem:[%s212 + $0x2c] sm:$0xf]
        %v261 = vld [vmem:[%s212 + $0x30] sm:$0xf]
        %v262 = vld [vmem:[%s212 + $0x34] sm:$0xf]
        %v263 = vld [vmem:[%s212 + $0x38] sm:$0xf]
        %v264 = vld [vmem:[%s212 + $0x3c] sm:$0xf]
        %v265 = vld [vmem:[%s215] sm:$0x1]
        %v267 = vperm.slane %v265, 0
        %v301 = vunpack.c.l.b16 %v217
        %v302 = vunpack.c.l.b16 %v218
        %v303 = vunpack.c.l.b16 %v219
        %v304 = vunpack.c.l.b16 %v220
        %v305 = vunpack.c.l.b16 %v221
        %v306 = vunpack.c.l.b16 %v222
        %v307 = vunpack.c.l.b16 %v223
        %v308 = vunpack.c.l.b16 %v224
        %v309 = vunpack.c.l.b16 %v225
        %v310 = vunpack.c.l.b16 %v226
        %v311 = vunpack.c.l.b16 %v227
        %v312 = vunpack.c.l.b16 %v228
        %v313 = vunpack.c.l.b16 %v229
        %v314 = vunpack.c.l.b16 %v230
        %v315 = vunpack.c.l.b16 %v231
        %v316 = vunpack.c.l.b16 %v232
        %v317 = vunpack.c.l.b16 %v233
        %v318 = vunpack.c.l.b16 %v234
        %v319 = vunpack.c.l.b16 %v235
        %v320 = vunpack.c.l.b16 %v236
        %v321 = vunpack.c.l.b16 %v237
        %v322 = vunpack.c.l.b16 %v238
        %v323 = vunpack.c.l.b16 %v239
        %v324 = vunpack.c.l.b16 %v240
        %v325 = vunpack.c.l.b16 %v241
        %v326 = vunpack.c.l.b16 %v242
        %v327 = vunpack.c.l.b16 %v243
        %v328 = vunpack.c.l.b16 %v244
        %v329 = vunpack.c.l.b16 %v245
        %v330 = vunpack.c.l.b16 %v246
        %v331 = vunpack.c.l.b16 %v247
        %v332 = vunpack.c.l.b16 %v248
        %v333 = vpack.c.b16 %v302, %v301
        %v334 = vpack.c.b16 %v304, %v303
        %v335 = vpack.c.b16 %v306, %v305
        %v336 = vpack.c.b16 %v308, %v307
        %v337 = vpack.c.b16 %v310, %v309
        %v338 = vpack.c.b16 %v312, %v311
        %v339 = vpack.c.b16 %v314, %v313
        %v340 = vpack.c.b16 %v316, %v315
        %v341 = vpack.c.b16 %v318, %v317
        %v342 = vpack.c.b16 %v320, %v319
        %v343 = vpack.c.b16 %v322, %v321
        %v344 = vpack.c.b16 %v324, %v323
        %v345 = vpack.c.b16 %v326, %v325
        %v346 = vpack.c.b16 %v328, %v327
        %v347 = vpack.c.b16 %v330, %v329
        %v348 = vpack.c.b16 %v332, %v331
        %v381 = vunpack.c.l.b16 %v249
        %v382 = vunpack.c.l.b16 %v250
        %v383 = vunpack.c.l.b16 %v251
        %v384 = vunpack.c.l.b16 %v252
        %v385 = vunpack.c.l.b16 %v253
        %v386 = vunpack.c.l.b16 %v254
        %v387 = vunpack.c.l.b16 %v255
        %v388 = vunpack.c.l.b16 %v256
        %v389 = vunpack.c.l.b16 %v257
        %v390 = vunpack.c.l.b16 %v258
        %v391 = vunpack.c.l.b16 %v259
        %v392 = vunpack.c.l.b16 %v260
        %v393 = vunpack.c.l.b16 %v261
        %v394 = vunpack.c.l.b16 %v262
        %v395 = vunpack.c.l.b16 %v263
        %v396 = vunpack.c.l.b16 %v264
        %v397 = vpack.c.b16 %v382, %v381
        %v398 = vpack.c.b16 %v384, %v383
        %v399 = vpack.c.b16 %v386, %v385
        %v400 = vpack.c.b16 %v388, %v387
        %v401 = vpack.c.b16 %v390, %v389
        %v402 = vpack.c.b16 %v392, %v391
        %v403 = vpack.c.b16 %v394, %v393
        %v404 = vpack.c.b16 %v396, %v395
        %413 = vmatpush.bf16.msra.mxu0 %v404
        %414 = vmatpush.bf16.msra.mxu0 %v403
        %415 = vmatpush.bf16.msra.mxu0 %v402
        %416 = vmatpush.bf16.msra.mxu0 %v401
        %417 = vmatpush.bf16.msra.mxu0 %v400
        %418 = vmatpush.bf16.msra.mxu0 %v399
        %419 = vmatpush.bf16.msra.mxu0 %v398
        %420 = vmatpush.bf16.msra.mxu0 %v397
        %421 = vmatmul.bf16.gmra.mxu0 %v333
        %v422 = vpop.f32.mrf.mxu0
        %v423 = vadd.f32 %v267, %v422
        %v424 = vpop.f32.mrf.mxu0
        %v425 = vadd.f32 %v267, %v424
        %426 = vmatmul.bf16.gmra.mxu0 %v334
        %v427 = vpop.f32.mrf.mxu0
        %v428 = vadd.f32 %v267, %v427
        %v429 = vpop.f32.mrf.mxu0
        %v430 = vadd.f32 %v267, %v429
        %431 = vmatmul.bf16.gmra.mxu0 %v335
        %v432 = vpop.f32.mrf.mxu0
        %v433 = vadd.f32 %v267, %v432
        %v434 = vpop.f32.mrf.mxu0
        %v435 = vadd.f32 %v267, %v434
        %436 = vmatmul.bf16.gmra.mxu0 %v336
        %v437 = vpop.f32.mrf.mxu0
        %v438 = vadd.f32 %v267, %v437
        %v439 = vpop.f32.mrf.mxu0
        %v440 = vadd.f32 %v267, %v439
        %441 = vmatmul.bf16.gmra.mxu0 %v337
        %v442 = vpop.f32.mrf.mxu0
        %v443 = vadd.f32 %v267, %v442
        %v444 = vpop.f32.mrf.mxu0
        %v445 = vadd.f32 %v267, %v444
        %446 = vmatmul.bf16.gmra.mxu0 %v338
        %v447 = vpop.f32.mrf.mxu0
        %v448 = vadd.f32 %v267, %v447
        %v449 = vpop.f32.mrf.mxu0
        %v450 = vadd.f32 %v267, %v449
        %451 = vmatmul.bf16.gmra.mxu0 %v339
        %v452 = vpop.f32.mrf.mxu0
        %v453 = vadd.f32 %v267, %v452
        %v454 = vpop.f32.mrf.mxu0
        %v455 = vadd.f32 %v267, %v454
        %456 = vmatmul.bf16.gmra.mxu0 %v340
        %v457 = vpop.f32.mrf.mxu0
        %v458 = vadd.f32 %v267, %v457
        %v459 = vpop.f32.mrf.mxu0
        %v460 = vadd.f32 %v267, %v459
        %461 = vmatmul.bf16.gmra.mxu0 %v341
        %v462 = vpop.f32.mrf.mxu0
        %v463 = vadd.f32 %v267, %v462
        %v464 = vpop.f32.mrf.mxu0
        %v465 = vadd.f32 %v267, %v464
        %466 = vmatmul.bf16.gmra.mxu0 %v342
        %v467 = vpop.f32.mrf.mxu0
        %v468 = vadd.f32 %v267, %v467
        %v469 = vpop.f32.mrf.mxu0
        %v470 = vadd.f32 %v267, %v469
        %471 = vmatmul.bf16.gmra.mxu0 %v343
        %v472 = vpop.f32.mrf.mxu0
        %v473 = vadd.f32 %v267, %v472
        %v474 = vpop.f32.mrf.mxu0
        %v475 = vadd.f32 %v267, %v474
        %476 = vmatmul.bf16.gmra.mxu0 %v344
        %v477 = vpop.f32.mrf.mxu0
        %v478 = vadd.f32 %v267, %v477
        %v479 = vpop.f32.mrf.mxu0
        %v480 = vadd.f32 %v267, %v479
        %481 = vmatmul.bf16.gmra.mxu0 %v345
        %v482 = vpop.f32.mrf.mxu0
        %v483 = vadd.f32 %v267, %v482
        %v484 = vpop.f32.mrf.mxu0
        %v485 = vadd.f32 %v267, %v484
        %486 = vmatmul.bf16.gmra.mxu0 %v346
        %v487 = vpop.f32.mrf.mxu0
        %v488 = vadd.f32 %v267, %v487
        %v489 = vpop.f32.mrf.mxu0
        %v490 = vadd.f32 %v267, %v489
        %491 = vmatmul.bf16.gmra.mxu0 %v347
        %v492 = vpop.f32.mrf.mxu0
        %v493 = vadd.f32 %v267, %v492
        %v494 = vpop.f32.mrf.mxu0
        %v495 = vadd.f32 %v267, %v494
        %496 = vmatmul.bf16.gmra.mxu0 %v348
        %v497 = vpop.f32.mrf.mxu0
        %v498 = vadd.f32 %v267, %v497
        %v499 = vpop.f32.mrf.mxu0
        %v500 = vadd.f32 %v267, %v499
        %501 = vdwg.mxu0
        %v502 = vxor.u32 %v423, 2147483648
        %v503 = vxor.u32 %v425, 2147483648
        %v504 = vxor.u32 %v428, 2147483648
        %v505 = vxor.u32 %v430, 2147483648
        %v506 = vxor.u32 %v433, 2147483648
        %v507 = vxor.u32 %v435, 2147483648
        %v508 = vxor.u32 %v438, 2147483648
        %v509 = vxor.u32 %v440, 2147483648
        %v510 = vxor.u32 %v443, 2147483648
        %v511 = vxor.u32 %v445, 2147483648
        %v512 = vxor.u32 %v448, 2147483648
        %v513 = vxor.u32 %v450, 2147483648
        %v514 = vxor.u32 %v453, 2147483648
        %v515 = vxor.u32 %v455, 2147483648
        %v516 = vxor.u32 %v458, 2147483648
        %v517 = vxor.u32 %v460, 2147483648
        %v518 = vxor.u32 %v463, 2147483648
        %v519 = vxor.u32 %v465, 2147483648
        %v520 = vxor.u32 %v468, 2147483648
        %v521 = vxor.u32 %v470, 2147483648
        %v522 = vxor.u32 %v473, 2147483648
        %v523 = vxor.u32 %v475, 2147483648
        %v524 = vxor.u32 %v478, 2147483648
        %v525 = vxor.u32 %v480, 2147483648
        %v526 = vxor.u32 %v483, 2147483648
        %v527 = vxor.u32 %v485, 2147483648
        %v528 = vxor.u32 %v488, 2147483648
        %v529 = vxor.u32 %v490, 2147483648
        %v530 = vxor.u32 %v493, 2147483648
        %v531 = vxor.u32 %v495, 2147483648
        %v532 = vxor.u32 %v498, 2147483648
        %v533 = vxor.u32 %v500, 2147483648
        %v534 = vmul.f32 %v502, 1.442695
        %v535 = vpow.pop %v534
        %v536 = vmul.f32 %v503, 1.442695
        %v537 = vpow.pop %v536
        %v538 = vmul.f32 %v504, 1.442695
        %v539 = vpow.pop %v538
        %v540 = vmul.f32 %v505, 1.442695
        %v541 = vpow.pop %v540
        %v542 = vmul.f32 %v506, 1.442695
        %v543 = vpow.pop %v542
        %v544 = vmul.f32 %v507, 1.442695
        %v545 = vpow.pop %v544
        %v546 = vmul.f32 %v508, 1.442695
        %v547 = vpow.pop %v546
        %v548 = vmul.f32 %v509, 1.442695
        %v549 = vpow.pop %v548
        %v550 = vmul.f32 %v510, 1.442695
        %v551 = vpow.pop %v550
        %v552 = vmul.f32 %v511, 1.442695
        %v553 = vpow.pop %v552
        %v554 = vmul.f32 %v512, 1.442695
        %v555 = vpow.pop %v554
        %v556 = vmul.f32 %v513, 1.442695
        %v557 = vpow.pop %v556
        %v558 = vmul.f32 %v514, 1.442695
        %v559 = vpow.pop %v558
        %v560 = vmul.f32 %v515, 1.442695
        %v561 = vpow.pop %v560
        %v562 = vmul.f32 %v516, 1.442695
        %v563 = vpow.pop %v562
        %v564 = vmul.f32 %v517, 1.442695
        %v565 = vpow.pop %v564
        %v566 = vmul.f32 %v518, 1.442695
        %v567 = vpow.pop %v566
        %v568 = vmul.f32 %v519, 1.442695
        %v569 = vpow.pop %v568
        %v570 = vmul.f32 %v520, 1.442695
        %v571 = vpow.pop %v570
        %v572 = vmul.f32 %v521, 1.442695
        %v573 = vpow.pop %v572
        %v574 = vmul.f32 %v522, 1.442695
        %v575 = vpow.pop %v574
        %v576 = vmul.f32 %v523, 1.442695
        %v577 = vpow.pop %v576
        %v578 = vmul.f32 %v524, 1.442695
        %v579 = vpow.pop %v578
        %v580 = vmul.f32 %v525, 1.442695
        %v581 = vpow.pop %v580
        %v582 = vmul.f32 %v526, 1.442695
        %v583 = vpow.pop %v582
        %v584 = vmul.f32 %v527, 1.442695
        %v585 = vpow.pop %v584
        %v586 = vmul.f32 %v528, 1.442695
        %v587 = vpow.pop %v586
        %v588 = vmul.f32 %v529, 1.442695
        %v589 = vpow.pop %v588
        %v590 = vmul.f32 %v530, 1.442695
        %v591 = vpow.pop %v590
        %v592 = vmul.f32 %v531, 1.442695
        %v593 = vpow.pop %v592
        %v594 = vmul.f32 %v532, 1.442695
        %v595 = vpow.pop %v594
        %v596 = vmul.f32 %v533, 1.442695
        %v597 = vpow.pop %v596
        %v598 = vadd.f32 %v535, 1.0
        %v599 = vadd.f32 %v537, 1.0
        %v600 = vadd.f32 %v539, 1.0
        %v601 = vadd.f32 %v541, 1.0
        %v602 = vadd.f32 %v543, 1.0
        %v603 = vadd.f32 %v545, 1.0
        %v604 = vadd.f32 %v547, 1.0
        %v605 = vadd.f32 %v549, 1.0
        %v606 = vadd.f32 %v551, 1.0
        %v607 = vadd.f32 %v553, 1.0
        %v608 = vadd.f32 %v555, 1.0
        %v609 = vadd.f32 %v557, 1.0
        %v610 = vadd.f32 %v559, 1.0
        %v611 = vadd.f32 %v561, 1.0
        %v612 = vadd.f32 %v563, 1.0
        %v613 = vadd.f32 %v565, 1.0
        %v614 = vadd.f32 %v567, 1.0
        %v615 = vadd.f32 %v569, 1.0
        %v616 = vadd.f32 %v571, 1.0
        %v617 = vadd.f32 %v573, 1.0
        %v618 = vadd.f32 %v575, 1.0
        %v619 = vadd.f32 %v577, 1.0
        %v620 = vadd.f32 %v579, 1.0
        %v621 = vadd.f32 %v581, 1.0
        %v622 = vadd.f32 %v583, 1.0
        %v623 = vadd.f32 %v585, 1.0
        %v624 = vadd.f32 %v587, 1.0
        %v625 = vadd.f32 %v589, 1.0
        %v626 = vadd.f32 %v591, 1.0
        %v627 = vadd.f32 %v593, 1.0
        %v628 = vadd.f32 %v595, 1.0
        %v629 = vadd.f32 %v597, 1.0
        %v630 = vrcp.pop %v598
        %v631 = vmul.f32 %v598, %v630
        %v632 = vsub.f32 1.0, %v631
        %v633 = vmul.f32 %v630, %v632
        %v634 = vadd.f32 %v630, %v633
        %vm635 = vweird.f32 %v598
        %vm636 = vweird.f32 %v630
        %vm637 = vmor %vm635, %vm636
        %v638 = vsel %vm637, %v630, %v634
        %v639 = vand.u32 2147483647, %v598
        %vm640 = vcmp.eq.f32.partialorder %v639, 8.507059e+37
        %v641 = vand.u32 %v598, 2147483648
        %v642 = vor.u32 1.1754944e-38, %v641
        %v643 = vsel %vm640, %v642, %v638
        %v644 = vmul.f32 1.0, %v643
        %v645 = vrcp.pop %v599
        %v646 = vmul.f32 %v599, %v645
        %v647 = vsub.f32 1.0, %v646
        %v648 = vmul.f32 %v645, %v647
        %v649 = vadd.f32 %v645, %v648
        %vm650 = vweird.f32 %v599
        %vm651 = vweird.f32 %v645
        %vm652 = vmor %vm650, %vm651
        %v653 = vsel %vm652, %v645, %v649
        %v654 = vand.u32 2147483647, %v599
        %vm655 = vcmp.eq.f32.partialorder %v654, 8.507059e+37
        %v656 = vand.u32 %v599, 2147483648
        %v657 = vor.u32 1.1754944e-38, %v656
        %v658 = vsel %vm655, %v657, %v653
        %v659 = vmul.f32 1.0, %v658
        %v660 = vrcp.pop %v600
        %v661 = vmul.f32 %v600, %v660
        %v662 = vsub.f32 1.0, %v661
        %v663 = vmul.f32 %v660, %v662
        %v664 = vadd.f32 %v660, %v663
        %vm665 = vweird.f32 %v600
        %vm666 = vweird.f32 %v660
        %vm667 = vmor %vm665, %vm666
        %v668 = vsel %vm667, %v660, %v664
        %v669 = vand.u32 2147483647, %v600
        %vm670 = vcmp.eq.f32.partialorder %v669, 8.507059e+37
        %v671 = vand.u32 %v600, 2147483648
        %v672 = vor.u32 1.1754944e-38, %v671
        %v673 = vsel %vm670, %v672, %v668
        %v674 = vmul.f32 1.0, %v673
        %v675 = vrcp.pop %v601
        %v676 = vmul.f32 %v601, %v675
        %v677 = vsub.f32 1.0, %v676
        %v678 = vmul.f32 %v675, %v677
        %v679 = vadd.f32 %v675, %v678
        %vm680 = vweird.f32 %v601
        %vm681 = vweird.f32 %v675
        %vm682 = vmor %vm680, %vm681
        %v683 = vsel %vm682, %v675, %v679
        %v684 = vand.u32 2147483647, %v601
        %vm685 = vcmp.eq.f32.partialorder %v684, 8.507059e+37
        %v686 = vand.u32 %v601, 2147483648
        %v687 = vor.u32 1.1754944e-38, %v686
        %v688 = vsel %vm685, %v687, %v683
        %v689 = vmul.f32 1.0, %v688
        %v690 = vrcp.pop %v602
        %v691 = vmul.f32 %v602, %v690
        %v692 = vsub.f32 1.0, %v691
        %v693 = vmul.f32 %v690, %v692
        %v694 = vadd.f32 %v690, %v693
        %vm695 = vweird.f32 %v602
        %vm696 = vweird.f32 %v690
        %vm697 = vmor %vm695, %vm696
        %v698 = vsel %vm697, %v690, %v694
        %v699 = vand.u32 2147483647, %v602
        %vm700 = vcmp.eq.f32.partialorder %v699, 8.507059e+37
        %v701 = vand.u32 %v602, 2147483648
        %v702 = vor.u32 1.1754944e-38, %v701
        %v703 = vsel %vm700, %v702, %v698
        %v704 = vmul.f32 1.0, %v703
        %v705 = vrcp.pop %v603
        %v706 = vmul.f32 %v603, %v705
        %v707 = vsub.f32 1.0, %v706
        %v708 = vmul.f32 %v705, %v707
        %v709 = vadd.f32 %v705, %v708
        %vm710 = vweird.f32 %v603
        %vm711 = vweird.f32 %v705
        %vm712 = vmor %vm710, %vm711
        %v713 = vsel %vm712, %v705, %v709
        %v714 = vand.u32 2147483647, %v603
        %vm715 = vcmp.eq.f32.partialorder %v714, 8.507059e+37
        %v716 = vand.u32 %v603, 2147483648
        %v717 = vor.u32 1.1754944e-38, %v716
        %v718 = vsel %vm715, %v717, %v713
        %v719 = vmul.f32 1.0, %v718
        %v720 = vrcp.pop %v604
        %v721 = vmul.f32 %v604, %v720
        %v722 = vsub.f32 1.0, %v721
        %v723 = vmul.f32 %v720, %v722
        %v724 = vadd.f32 %v720, %v723
        %vm725 = vweird.f32 %v604
        %vm726 = vweird.f32 %v720
        %vm727 = vmor %vm725, %vm726
        %v728 = vsel %vm727, %v720, %v724
        %v729 = vand.u32 2147483647, %v604
        %vm730 = vcmp.eq.f32.partialorder %v729, 8.507059e+37
        %v731 = vand.u32 %v604, 2147483648
        %v732 = vor.u32 1.1754944e-38, %v731
        %v733 = vsel %vm730, %v732, %v728
        %v734 = vmul.f32 1.0, %v733
        %v735 = vrcp.pop %v605
        %v736 = vmul.f32 %v605, %v735
        %v737 = vsub.f32 1.0, %v736
        %v738 = vmul.f32 %v735, %v737
        %v739 = vadd.f32 %v735, %v738
        %vm740 = vweird.f32 %v605
        %vm741 = vweird.f32 %v735
        %vm742 = vmor %vm740, %vm741
        %v743 = vsel %vm742, %v735, %v739
        %v744 = vand.u32 2147483647, %v605
        %vm745 = vcmp.eq.f32.partialorder %v744, 8.507059e+37
        %v746 = vand.u32 %v605, 2147483648
        %v747 = vor.u32 1.1754944e-38, %v746
        %v748 = vsel %vm745, %v747, %v743
        %v749 = vmul.f32 1.0, %v748
        %v750 = vrcp.pop %v606
        %v751 = vmul.f32 %v606, %v750
        %v752 = vsub.f32 1.0, %v751
        %v753 = vmul.f32 %v750, %v752
        %v754 = vadd.f32 %v750, %v753
        %vm755 = vweird.f32 %v606
        %vm756 = vweird.f32 %v750
        %vm757 = vmor %vm755, %vm756
        %v758 = vsel %vm757, %v750, %v754
        %v759 = vand.u32 2147483647, %v606
        %vm760 = vcmp.eq.f32.partialorder %v759, 8.507059e+37
        %v761 = vand.u32 %v606, 2147483648
        %v762 = vor.u32 1.1754944e-38, %v761
        %v763 = vsel %vm760, %v762, %v758
        %v764 = vmul.f32 1.0, %v763
        %v765 = vrcp.pop %v607
        %v766 = vmul.f32 %v607, %v765
        %v767 = vsub.f32 1.0, %v766
        %v768 = vmul.f32 %v765, %v767
        %v769 = vadd.f32 %v765, %v768
        %vm770 = vweird.f32 %v607
        %vm771 = vweird.f32 %v765
        %vm772 = vmor %vm770, %vm771
        %v773 = vsel %vm772, %v765, %v769
        %v774 = vand.u32 2147483647, %v607
        %vm775 = vcmp.eq.f32.partialorder %v774, 8.507059e+37
        %v776 = vand.u32 %v607, 2147483648
        %v777 = vor.u32 1.1754944e-38, %v776
        %v778 = vsel %vm775, %v777, %v773
        %v779 = vmul.f32 1.0, %v778
        %v780 = vrcp.pop %v608
        %v781 = vmul.f32 %v608, %v780
        %v782 = vsub.f32 1.0, %v781
        %v783 = vmul.f32 %v780, %v782
        %v784 = vadd.f32 %v780, %v783
        %vm785 = vweird.f32 %v608
        %vm786 = vweird.f32 %v780
        %vm787 = vmor %vm785, %vm786
        %v788 = vsel %vm787, %v780, %v784
        %v789 = vand.u32 2147483647, %v608
        %vm790 = vcmp.eq.f32.partialorder %v789, 8.507059e+37
        %v791 = vand.u32 %v608, 2147483648
        %v792 = vor.u32 1.1754944e-38, %v791
        %v793 = vsel %vm790, %v792, %v788
        %v794 = vmul.f32 1.0, %v793
        %v795 = vrcp.pop %v609
        %v796 = vmul.f32 %v609, %v795
        %v797 = vsub.f32 1.0, %v796
        %v798 = vmul.f32 %v795, %v797
        %v799 = vadd.f32 %v795, %v798
        %vm800 = vweird.f32 %v609
        %vm801 = vweird.f32 %v795
        %vm802 = vmor %vm800, %vm801
        %v803 = vsel %vm802, %v795, %v799
        %v804 = vand.u32 2147483647, %v609
        %vm805 = vcmp.eq.f32.partialorder %v804, 8.507059e+37
        %v806 = vand.u32 %v609, 2147483648
        %v807 = vor.u32 1.1754944e-38, %v806
        %v808 = vsel %vm805, %v807, %v803
        %v809 = vmul.f32 1.0, %v808
        %v810 = vrcp.pop %v610
        %v811 = vmul.f32 %v610, %v810
        %v812 = vsub.f32 1.0, %v811
        %v813 = vmul.f32 %v810, %v812
        %v814 = vadd.f32 %v810, %v813
        %vm815 = vweird.f32 %v610
        %vm816 = vweird.f32 %v810
        %vm817 = vmor %vm815, %vm816
        %v818 = vsel %vm817, %v810, %v814
        %v819 = vand.u32 2147483647, %v610
        %vm820 = vcmp.eq.f32.partialorder %v819, 8.507059e+37
        %v821 = vand.u32 %v610, 2147483648
        %v822 = vor.u32 1.1754944e-38, %v821
        %v823 = vsel %vm820, %v822, %v818
        %v824 = vmul.f32 1.0, %v823
        %v825 = vrcp.pop %v611
        %v826 = vmul.f32 %v611, %v825
        %v827 = vsub.f32 1.0, %v826
        %v828 = vmul.f32 %v825, %v827
        %v829 = vadd.f32 %v825, %v828
        %vm830 = vweird.f32 %v611
        %vm831 = vweird.f32 %v825
        %vm832 = vmor %vm830, %vm831
        %v833 = vsel %vm832, %v825, %v829
        %v834 = vand.u32 2147483647, %v611
        %vm835 = vcmp.eq.f32.partialorder %v834, 8.507059e+37
        %v836 = vand.u32 %v611, 2147483648
        %v837 = vor.u32 1.1754944e-38, %v836
        %v838 = vsel %vm835, %v837, %v833
        %v839 = vmul.f32 1.0, %v838
        %v840 = vrcp.pop %v612
        %v841 = vmul.f32 %v612, %v840
        %v842 = vsub.f32 1.0, %v841
        %v843 = vmul.f32 %v840, %v842
        %v844 = vadd.f32 %v840, %v843
        %vm845 = vweird.f32 %v612
        %vm846 = vweird.f32 %v840
        %vm847 = vmor %vm845, %vm846
        %v848 = vsel %vm847, %v840, %v844
        %v849 = vand.u32 2147483647, %v612
        %vm850 = vcmp.eq.f32.partialorder %v849, 8.507059e+37
        %v851 = vand.u32 %v612, 2147483648
        %v852 = vor.u32 1.1754944e-38, %v851
        %v853 = vsel %vm850, %v852, %v848
        %v854 = vmul.f32 1.0, %v853
        %v855 = vrcp.pop %v613
        %v856 = vmul.f32 %v613, %v855
        %v857 = vsub.f32 1.0, %v856
        %v858 = vmul.f32 %v855, %v857
        %v859 = vadd.f32 %v855, %v858
        %vm860 = vweird.f32 %v613
        %vm861 = vweird.f32 %v855
        %vm862 = vmor %vm860, %vm861
        %v863 = vsel %vm862, %v855, %v859
        %v864 = vand.u32 2147483647, %v613
        %vm865 = vcmp.eq.f32.partialorder %v864, 8.507059e+37
        %v866 = vand.u32 %v613, 2147483648
        %v867 = vor.u32 1.1754944e-38, %v866
        %v868 = vsel %vm865, %v867, %v863
        %v869 = vmul.f32 1.0, %v868
        %v870 = vrcp.pop %v614
        %v871 = vmul.f32 %v614, %v870
        %v872 = vsub.f32 1.0, %v871
        %v873 = vmul.f32 %v870, %v872
        %v874 = vadd.f32 %v870, %v873
        %vm875 = vweird.f32 %v614
        %vm876 = vweird.f32 %v870
        %vm877 = vmor %vm875, %vm876
        %v878 = vsel %vm877, %v870, %v874
        %v879 = vand.u32 2147483647, %v614
        %vm880 = vcmp.eq.f32.partialorder %v879, 8.507059e+37
        %v881 = vand.u32 %v614, 2147483648
        %v882 = vor.u32 1.1754944e-38, %v881
        %v883 = vsel %vm880, %v882, %v878
        %v884 = vmul.f32 1.0, %v883
        %v885 = vrcp.pop %v615
        %v886 = vmul.f32 %v615, %v885
        %v887 = vsub.f32 1.0, %v886
        %v888 = vmul.f32 %v885, %v887
        %v889 = vadd.f32 %v885, %v888
        %vm890 = vweird.f32 %v615
        %vm891 = vweird.f32 %v885
        %vm892 = vmor %vm890, %vm891
        %v893 = vsel %vm892, %v885, %v889
        %v894 = vand.u32 2147483647, %v615
        %vm895 = vcmp.eq.f32.partialorder %v894, 8.507059e+37
        %v896 = vand.u32 %v615, 2147483648
        %v897 = vor.u32 1.1754944e-38, %v896
        %v898 = vsel %vm895, %v897, %v893
        %v899 = vmul.f32 1.0, %v898
        %v900 = vrcp.pop %v616
        %v901 = vmul.f32 %v616, %v900
        %v902 = vsub.f32 1.0, %v901
        %v903 = vmul.f32 %v900, %v902
        %v904 = vadd.f32 %v900, %v903
        %vm905 = vweird.f32 %v616
        %vm906 = vweird.f32 %v900
        %vm907 = vmor %vm905, %vm906
        %v908 = vsel %vm907, %v900, %v904
        %v909 = vand.u32 2147483647, %v616
        %vm910 = vcmp.eq.f32.partialorder %v909, 8.507059e+37
        %v911 = vand.u32 %v616, 2147483648
        %v912 = vor.u32 1.1754944e-38, %v911
        %v913 = vsel %vm910, %v912, %v908
        %v914 = vmul.f32 1.0, %v913
        %v915 = vrcp.pop %v617
        %v916 = vmul.f32 %v617, %v915
        %v917 = vsub.f32 1.0, %v916
        %v918 = vmul.f32 %v915, %v917
        %v919 = vadd.f32 %v915, %v918
        %vm920 = vweird.f32 %v617
        %vm921 = vweird.f32 %v915
        %vm922 = vmor %vm920, %vm921
        %v923 = vsel %vm922, %v915, %v919
        %v924 = vand.u32 2147483647, %v617
        %vm925 = vcmp.eq.f32.partialorder %v924, 8.507059e+37
        %v926 = vand.u32 %v617, 2147483648
        %v927 = vor.u32 1.1754944e-38, %v926
        %v928 = vsel %vm925, %v927, %v923
        %v929 = vmul.f32 1.0, %v928
        %v930 = vrcp.pop %v618
        %v931 = vmul.f32 %v618, %v930
        %v932 = vsub.f32 1.0, %v931
        %v933 = vmul.f32 %v930, %v932
        %v934 = vadd.f32 %v930, %v933
        %vm935 = vweird.f32 %v618
        %vm936 = vweird.f32 %v930
        %vm937 = vmor %vm935, %vm936
        %v938 = vsel %vm937, %v930, %v934
        %v939 = vand.u32 2147483647, %v618
        %vm940 = vcmp.eq.f32.partialorder %v939, 8.507059e+37
        %v941 = vand.u32 %v618, 2147483648
        %v942 = vor.u32 1.1754944e-38, %v941
        %v943 = vsel %vm940, %v942, %v938
        %v944 = vmul.f32 1.0, %v943
        %v945 = vrcp.pop %v619
        %v946 = vmul.f32 %v619, %v945
        %v947 = vsub.f32 1.0, %v946
        %v948 = vmul.f32 %v945, %v947
        %v949 = vadd.f32 %v945, %v948
        %vm950 = vweird.f32 %v619
        %vm951 = vweird.f32 %v945
        %vm952 = vmor %vm950, %vm951
        %v953 = vsel %vm952, %v945, %v949
        %v954 = vand.u32 2147483647, %v619
        %vm955 = vcmp.eq.f32.partialorder %v954, 8.507059e+37
        %v956 = vand.u32 %v619, 2147483648
        %v957 = vor.u32 1.1754944e-38, %v956
        %v958 = vsel %vm955, %v957, %v953
        %v959 = vmul.f32 1.0, %v958
        %v960 = vrcp.pop %v620
        %v961 = vmul.f32 %v620, %v960
        %v962 = vsub.f32 1.0, %v961
        %v963 = vmul.f32 %v960, %v962
        %v964 = vadd.f32 %v960, %v963
        %vm965 = vweird.f32 %v620
        %vm966 = vweird.f32 %v960
        %vm967 = vmor %vm965, %vm966
        %v968 = vsel %vm967, %v960, %v964
        %v969 = vand.u32 2147483647, %v620
        %vm970 = vcmp.eq.f32.partialorder %v969, 8.507059e+37
        %v971 = vand.u32 %v620, 2147483648
        %v972 = vor.u32 1.1754944e-38, %v971
        %v973 = vsel %vm970, %v972, %v968
        %v974 = vmul.f32 1.0, %v973
        %v975 = vrcp.pop %v621
        %v976 = vmul.f32 %v621, %v975
        %v977 = vsub.f32 1.0, %v976
        %v978 = vmul.f32 %v975, %v977
        %v979 = vadd.f32 %v975, %v978
        %vm980 = vweird.f32 %v621
        %vm981 = vweird.f32 %v975
        %vm982 = vmor %vm980, %vm981
        %v983 = vsel %vm982, %v975, %v979
        %v984 = vand.u32 2147483647, %v621
        %vm985 = vcmp.eq.f32.partialorder %v984, 8.507059e+37
        %v986 = vand.u32 %v621, 2147483648
        %v987 = vor.u32 1.1754944e-38, %v986
        %v988 = vsel %vm985, %v987, %v983
        %v989 = vmul.f32 1.0, %v988
        %v990 = vrcp.pop %v622
        %v991 = vmul.f32 %v622, %v990
        %v992 = vsub.f32 1.0, %v991
        %v993 = vmul.f32 %v990, %v992
        %v994 = vadd.f32 %v990, %v993
        %vm995 = vweird.f32 %v622
        %vm996 = vweird.f32 %v990
        %vm997 = vmor %vm995, %vm996
        %v998 = vsel %vm997, %v990, %v994
        %v999 = vand.u32 2147483647, %v622
        %vm1000 = vcmp.eq.f32.partialorder %v999, 8.507059e+37
        %v1001 = vand.u32 %v622, 2147483648
        %v1002 = vor.u32 1.1754944e-38, %v1001
        %v1003 = vsel %vm1000, %v1002, %v998
        %v1004 = vmul.f32 1.0, %v1003
        %v1005 = vrcp.pop %v623
        %v1006 = vmul.f32 %v623, %v1005
        %v1007 = vsub.f32 1.0, %v1006
        %v1008 = vmul.f32 %v1005, %v1007
        %v1009 = vadd.f32 %v1005, %v1008
        %vm1010 = vweird.f32 %v623
        %vm1011 = vweird.f32 %v1005
        %vm1012 = vmor %vm1010, %vm1011
        %v1013 = vsel %vm1012, %v1005, %v1009
        %v1014 = vand.u32 2147483647, %v623
        %vm1015 = vcmp.eq.f32.partialorder %v1014, 8.507059e+37
        %v1016 = vand.u32 %v623, 2147483648
        %v1017 = vor.u32 1.1754944e-38, %v1016
        %v1018 = vsel %vm1015, %v1017, %v1013
        %v1019 = vmul.f32 1.0, %v1018
        %v1020 = vrcp.pop %v624
        %v1021 = vmul.f32 %v624, %v1020
        %v1022 = vsub.f32 1.0, %v1021
        %v1023 = vmul.f32 %v1020, %v1022
        %v1024 = vadd.f32 %v1020, %v1023
        %vm1025 = vweird.f32 %v624
        %vm1026 = vweird.f32 %v1020
        %vm1027 = vmor %vm1025, %vm1026
        %v1028 = vsel %vm1027, %v1020, %v1024
        %v1029 = vand.u32 2147483647, %v624
        %vm1030 = vcmp.eq.f32.partialorder %v1029, 8.507059e+37
        %v1031 = vand.u32 %v624, 2147483648
        %v1032 = vor.u32 1.1754944e-38, %v1031
        %v1033 = vsel %vm1030, %v1032, %v1028
        %v1034 = vmul.f32 1.0, %v1033
        %v1035 = vrcp.pop %v625
        %v1036 = vmul.f32 %v625, %v1035
        %v1037 = vsub.f32 1.0, %v1036
        %v1038 = vmul.f32 %v1035, %v1037
        %v1039 = vadd.f32 %v1035, %v1038
        %vm1040 = vweird.f32 %v625
        %vm1041 = vweird.f32 %v1035
        %vm1042 = vmor %vm1040, %vm1041
        %v1043 = vsel %vm1042, %v1035, %v1039
        %v1044 = vand.u32 2147483647, %v625
        %vm1045 = vcmp.eq.f32.partialorder %v1044, 8.507059e+37
        %v1046 = vand.u32 %v625, 2147483648
        %v1047 = vor.u32 1.1754944e-38, %v1046
        %v1048 = vsel %vm1045, %v1047, %v1043
        %v1049 = vmul.f32 1.0, %v1048
        %v1050 = vrcp.pop %v626
        %v1051 = vmul.f32 %v626, %v1050
        %v1052 = vsub.f32 1.0, %v1051
        %v1053 = vmul.f32 %v1050, %v1052
        %v1054 = vadd.f32 %v1050, %v1053
        %vm1055 = vweird.f32 %v626
        %vm1056 = vweird.f32 %v1050
        %vm1057 = vmor %vm1055, %vm1056
        %v1058 = vsel %vm1057, %v1050, %v1054
        %v1059 = vand.u32 2147483647, %v626
        %vm1060 = vcmp.eq.f32.partialorder %v1059, 8.507059e+37
        %v1061 = vand.u32 %v626, 2147483648
        %v1062 = vor.u32 1.1754944e-38, %v1061
        %v1063 = vsel %vm1060, %v1062, %v1058
        %v1064 = vmul.f32 1.0, %v1063
        %v1065 = vrcp.pop %v627
        %v1066 = vmul.f32 %v627, %v1065
        %v1067 = vsub.f32 1.0, %v1066
        %v1068 = vmul.f32 %v1065, %v1067
        %v1069 = vadd.f32 %v1065, %v1068
        %vm1070 = vweird.f32 %v627
        %vm1071 = vweird.f32 %v1065
        %vm1072 = vmor %vm1070, %vm1071
        %v1073 = vsel %vm1072, %v1065, %v1069
        %v1074 = vand.u32 2147483647, %v627
        %vm1075 = vcmp.eq.f32.partialorder %v1074, 8.507059e+37
        %v1076 = vand.u32 %v627, 2147483648
        %v1077 = vor.u32 1.1754944e-38, %v1076
        %v1078 = vsel %vm1075, %v1077, %v1073
        %v1079 = vmul.f32 1.0, %v1078
        %v1080 = vrcp.pop %v628
        %v1081 = vmul.f32 %v628, %v1080
        %v1082 = vsub.f32 1.0, %v1081
        %v1083 = vmul.f32 %v1080, %v1082
        %v1084 = vadd.f32 %v1080, %v1083
        %vm1085 = vweird.f32 %v628
        %vm1086 = vweird.f32 %v1080
        %vm1087 = vmor %vm1085, %vm1086
        %v1088 = vsel %vm1087, %v1080, %v1084
        %v1089 = vand.u32 2147483647, %v628
        %vm1090 = vcmp.eq.f32.partialorder %v1089, 8.507059e+37
        %v1091 = vand.u32 %v628, 2147483648
        %v1092 = vor.u32 1.1754944e-38, %v1091
        %v1093 = vsel %vm1090, %v1092, %v1088
        %v1094 = vmul.f32 1.0, %v1093
        %v1095 = vrcp.pop %v629
        %v1096 = vmul.f32 %v629, %v1095
        %v1097 = vsub.f32 1.0, %v1096
        %v1098 = vmul.f32 %v1095, %v1097
        %v1099 = vadd.f32 %v1095, %v1098
        %vm1100 = vweird.f32 %v629
        %vm1101 = vweird.f32 %v1095
        %vm1102 = vmor %vm1100, %vm1101
        %v1103 = vsel %vm1102, %v1095, %v1099
        %v1104 = vand.u32 2147483647, %v629
        %vm1105 = vcmp.eq.f32.partialorder %v1104, 8.507059e+37
        %v1106 = vand.u32 %v629, 2147483648
        %v1107 = vor.u32 1.1754944e-38, %v1106
        %v1108 = vsel %vm1105, %v1107, %v1103
        %v1109 = vmul.f32 1.0, %v1108
        %v1110 = vmul.f32 %v423, %v644
        %v1111 = vmul.f32 %v425, %v659
        %v1112 = vmul.f32 %v428, %v674
        %v1113 = vmul.f32 %v430, %v689
        %v1114 = vmul.f32 %v433, %v704
        %v1115 = vmul.f32 %v435, %v719
        %v1116 = vmul.f32 %v438, %v734
        %v1117 = vmul.f32 %v440, %v749
        %v1118 = vmul.f32 %v443, %v764
        %v1119 = vmul.f32 %v445, %v779
        %v1120 = vmul.f32 %v448, %v794
        %v1121 = vmul.f32 %v450, %v809
        %v1122 = vmul.f32 %v453, %v824
        %v1123 = vmul.f32 %v455, %v839
        %v1124 = vmul.f32 %v458, %v854
        %v1125 = vmul.f32 %v460, %v869
        %v1126 = vmul.f32 %v463, %v884
        %v1127 = vmul.f32 %v465, %v899
        %v1128 = vmul.f32 %v468, %v914
        %v1129 = vmul.f32 %v470, %v929
        %v1130 = vmul.f32 %v473, %v944
        %v1131 = vmul.f32 %v475, %v959
        %v1132 = vmul.f32 %v478, %v974
        %v1133 = vmul.f32 %v480, %v989
        %v1134 = vmul.f32 %v483, %v1004
        %v1135 = vmul.f32 %v485, %v1019
        %v1136 = vmul.f32 %v488, %v1034
        %v1137 = vmul.f32 %v490, %v1049
        %v1138 = vmul.f32 %v493, %v1064
        %v1139 = vmul.f32 %v495, %v1079
        %v1140 = vmul.f32 %v498, %v1094
        %v1141 = vmul.f32 %v500, %v1109
        %1142 = vst [vmem:[%s202] sm:$0xff] %v1110
        %1143 = vst [vmem:[%s202 + $0x8] sm:$0xff] %v1111
        %1144 = vst [vmem:[%s202 + $0x10] sm:$0xff] %v1112
        %1145 = vst [vmem:[%s202 + $0x18] sm:$0xff] %v1113
        %1146 = vst [vmem:[%s202 + $0x20] sm:$0xff] %v1114
        %1147 = vst [vmem:[%s202 + $0x28] sm:$0xff] %v1115
        %1148 = vst [vmem:[%s202 + $0x30] sm:$0xff] %v1116
        %1149 = vst [vmem:[%s202 + $0x38] sm:$0xff] %v1117
        %1150 = vst [vmem:[%s202 + $0x40] sm:$0xff] %v1118
        %1151 = vst [vmem:[%s202 + $0x48] sm:$0xff] %v1119
        %1152 = vst [vmem:[%s202 + $0x50] sm:$0xff] %v1120
        %1153 = vst [vmem:[%s202 + $0x58] sm:$0xff] %v1121
        %1154 = vst [vmem:[%s202 + $0x60] sm:$0xff] %v1122
        %1155 = vst [vmem:[%s202 + $0x68] sm:$0xff] %v1123
        %1156 = vst [vmem:[%s202 + $0x70] sm:$0xff] %v1124
        %1157 = vst [vmem:[%s202 + $0x78] sm:$0xff] %v1125
        %1158 = vst [vmem:[%s202 + $0x80] sm:$0xff] %v1126
        %1159 = vst [vmem:[%s202 + $0x88] sm:$0xff] %v1127
        %1160 = vst [vmem:[%s202 + $0x90] sm:$0xff] %v1128
        %1161 = vst [vmem:[%s202 + $0x98] sm:$0xff] %v1129
        %1162 = vst [vmem:[%s202 + $0xa0] sm:$0xff] %v1130
        %1163 = vst [vmem:[%s202 + $0xa8] sm:$0xff] %v1131
        %1164 = vst [vmem:[%s202 + $0xb0] sm:$0xff] %v1132
        %1165 = vst [vmem:[%s202 + $0xb8] sm:$0xff] %v1133
        %1166 = vst [vmem:[%s202 + $0xc0] sm:$0xff] %v1134
        %1167 = vst [vmem:[%s202 + $0xc8] sm:$0xff] %v1135
        %1168 = vst [vmem:[%s202 + $0xd0] sm:$0xff] %v1136
        %1169 = vst [vmem:[%s202 + $0xd8] sm:$0xff] %v1137
        %1170 = vst [vmem:[%s202 + $0xe0] sm:$0xff] %v1138
        %1171 = vst [vmem:[%s202 + $0xe8] sm:$0xff] %v1139
        %1172 = vst [vmem:[%s202 + $0xf0] sm:$0xff] %v1140
        %1173 = vst [vmem:[%s202 + $0xf8] sm:$0xff] %v1141
        %s1174 = sand.u32 %s117, 1
        %s1175 = scalar_lea.sflag [#allocation3], %s1174
        %s1176 = sand.u32 %s117, 1
        %s1177 = smul.addr %s1176, 256
        %s1178 = scalar_lea.vmem [#allocation2], %s1177
        // Predicated region
        $region33: #{conv_bn_silu_forward.1} parent=31 // pred_check
          %p1179 = pneg %p127
        $region34: #{conv_bn_silu_forward.1} parent=31 // pred_check_branch
          %1181 = sbr.rel (%p1179) target = $region36
        $region35: #{conv_bn_silu_forward.1} parent=31 // pred_region
          %s1182 = smul.u32 32, %s21
          %1184 = vsyncadd %s1175, 0
          %s1185 = sadd.s32 %s22, %s1182
          %s1186 = smul.addr %s1185, 8
          %s1187 = scalar_lea.hbm %s3, %s1186
          %s1188 = sshll.u32 %s1178, 4
          %s1189 = int_to_ptr.vmem [resolvable:$true] %s1188
          %s1190 = sshll.u32 %s1187, 4
          %s1191 = int_to_ptr.hbm [resolvable:$true] %s1190
          %1196 = dma.vmem_to_hbm [thread:$0]  %s1189, 4096, %s1191, %s1175, 128, 128, 8
        $region36: #{conv_bn_silu_forward.1} parent=31 // pred_fallthru
          _
      $region32: #{conv_bn_silu_forward.1} parent=5 // pred_fallthru
        _
      %p1197 = scmp.le.s32.totalorder 2, %s12
      // Predicated region
      $region37: #{conv_bn_silu_forward.1} parent=5 // pred_check
        %p1198 = pneg %p1197
      $region38: #{conv_bn_silu_forward.1} parent=5 // pred_check_branch
        %1200 = sbr.rel (%p1198) target = $region40
      $region39: #{conv_bn_silu_forward.1} parent=5 // pred_region
        %s1201 = ssub.s32 %s12, 2
        // Predicated region
        $region41: #{conv_bn_silu_forward.1} parent=39 // pred_check
          %p1202 = pneg %p133
        $region42: #{conv_bn_silu_forward.1} parent=39 // pred_check_branch
          %1204 = sbr.rel (%p1202) target = $region44
        $region43: #{conv_bn_silu_forward.1} parent=39 // pred_region
          %s1205 = sand.u32 %s118, 1
          %s1206 = scalar_lea.sflag [#allocation3], %s1205
          %s1207 = sand.u32 %s118, 1
          %s1208 = smul.addr %s1207, 256
          %s1209 = scalar_lea.vmem [#allocation2], %s1208
          %1211 = dma.done %s1206, 4096
        $region44: #{conv_bn_silu_forward.1} parent=39 // pred_fallthru
          _
      $region40: #{conv_bn_silu_forward.1} parent=5 // pred_fallthru
        _
    $region6: #{conv_bn_silu_forward.1} parent=1 // loop_footer
      %s16 = sadd.s32 1, %s12
    $region7: #{conv_bn_silu_forward.1} parent=1 // loop_footer_branch
      %11 = sbr.rel target = $region3
    $region8: #{conv_bn_silu_forward.1} parent=1 // loop_exit
      _
    %1212 = vsyncpa [#allocation3], 1
    %s1213 = scalar_lea.sflag [#allocation3], 1
    %1214 = vsyncpa %s1213, 1

</llo_original>
